<compile_context>
chip_gen: v7x
topology: tpu7x:2x2x1
jax: 0.10.0
libtpu: 0.0.40
codegen_flags: <defaults>
</compile_context>

<pallas_src>
import functools

import jax
import jax.numpy as jnp
from jax.experimental import pallas as pl
from jax.experimental.pallas import tpu as pltpu

EMB_VOCAB = 54
EMB_DIM = 10
N_CARDS = 33
OBS_DIM = 172
IN_DIM = OBS_DIM + N_CARDS * EMB_DIM   # 502
IN_PAD = 512                           # 502 padded to 4*128 for clean MXU tiling
HIDDEN = 256
OUT_DIM = 33
OUT_PAD = 128                          # 33 padded to one full lane tile
NEG_INF = -1e30


def _round_up(n, m):
    return ((n + m - 1) // m) * m


def _kitty_mlp_kernel(x_ref,
                      w1_ref, b1_ref,
                      w2_ref, b2_ref,
                      w3_ref, b3_ref,
                      w4_ref, b4_ref,
                      o_ref):
    """fc1->relu->fc2->relu->fc3->relu->fc4->softmax on one batch tile."""
    x = x_ref[...]                                                   # (tb, 512) f32

    h = jnp.dot(x.astype(jnp.bfloat16), w1_ref[...],
                preferred_element_type=jnp.float32) + b1_ref[...]
    h = jnp.maximum(h, 0.0)

    h = jnp.dot(h.astype(jnp.bfloat16), w2_ref[...],
                preferred_element_type=jnp.float32) + b2_ref[...]
    h = jnp.maximum(h, 0.0)

    h = jnp.dot(h.astype(jnp.bfloat16), w3_ref[...],
                preferred_element_type=jnp.float32) + b3_ref[...]
    h = jnp.maximum(h, 0.0)

    logits = jnp.dot(h.astype(jnp.bfloat16), w4_ref[...],
                     preferred_element_type=jnp.float32) + b4_ref[...]   # (tb, 128)

    # Numerically stable softmax; padded columns carry a -1e30 bias so they get
    # ~0 mass and never win the row max.  Divide rides the EUP reciprocal slot.
    m = jnp.max(logits, axis=-1, keepdims=True)
    e = jnp.exp(logits - m)
    denom = jnp.sum(e, axis=-1, keepdims=True)
    o_ref[...] = e * pl.reciprocal(denom, approx=True)


def init_params(key):
    """f32, unpadded params mirroring KittyArgmaxModel.__init__, (in, out) layout."""
    ks = jax.random.split(key, 9)

    def lin(kw, fan_in, fan_out):
        return jax.random.normal(kw, (fan_in, fan_out), jnp.float32) / jnp.sqrt(fan_in)

    return {
        "emb": jax.random.normal(ks[0], (EMB_VOCAB, EMB_DIM), jnp.float32),
        "w1": lin(ks[1], IN_DIM, HIDDEN),
        "b1": jax.random.normal(ks[2], (1, HIDDEN), jnp.float32) * 0.01,
        "w2": lin(ks[3], HIDDEN, HIDDEN),
        "b2": jax.random.normal(ks[4], (1, HIDDEN), jnp.float32) * 0.01,
        "w3": lin(ks[5], HIDDEN, HIDDEN),
        "b3": jax.random.normal(ks[6], (1, HIDDEN), jnp.float32) * 0.01,
        "w4": lin(ks[7], HIDDEN, OUT_DIM),
        "b4": jax.random.normal(ks[8], (1, OUT_DIM), jnp.float32) * 0.01,
    }


def pack_params(params):
    """Pad / cast params into the kernel layout (K 502->512, N 33->128, bf16 weights)."""
    w1 = jnp.zeros((IN_PAD, HIDDEN), jnp.float32).at[:IN_DIM].set(params["w1"])
    w4 = jnp.zeros((HIDDEN, OUT_PAD), jnp.float32).at[:, :OUT_DIM].set(params["w4"])
    b4 = jnp.full((1, OUT_PAD), NEG_INF, jnp.float32).at[:, :OUT_DIM].set(params["b4"])
    return {
        "emb": params["emb"],
        "w1": w1.astype(jnp.bfloat16),
        "b1": params["b1"],
        "w2": params["w2"].astype(jnp.bfloat16),
        "b2": params["b2"],
        "w3": params["w3"].astype(jnp.bfloat16),
        "b3": params["b3"],
        "w4": w4.astype(jnp.bfloat16),
        "b4": b4,
    }


@functools.partial(jax.jit, static_argnames=("tile_b",))
def kitty_argmax_forward(packed, x, cards, *, tile_b=512):
    """x: (B, 172) float32, cards: (B, 33) int32 in [0, 54). Returns (B, 33) probs."""
    B = x.shape[0]
    # Glue: embedding lookup + hstack + pad contraction dim to 512.
    card_emb = jnp.take(packed["emb"], cards, axis=0).reshape(B, N_CARDS * EMB_DIM)
    feat = jnp.concatenate(
        [x, card_emb, jnp.zeros((B, IN_PAD - IN_DIM), x.dtype)], axis=-1)   # (B, 512)

    # Batch tiling: tb is a multiple of 8 (sublane); large tiles amortize the
    # ~0.35us per-grid-step overhead.  feat tile (512x512 f32) + out tile
    # (512x128 f32) double-buffered plus ~0.6 MiB of resident weights stays
    # comfortably inside the scoped-VMEM default on v5e/v6e/v7x.
    tb = min(tile_b, _round_up(B, 8))
    b_pad = _round_up(B, tb)
    if b_pad != B:
        feat = jnp.pad(feat, ((0, b_pad - B), (0, 0)))
    grid = (b_pad // tb,)

    def resident(shape):
        return pl.BlockSpec(shape, lambda i: (0, 0))      # weight stays in VMEM

    flops = 2 * b_pad * (IN_PAD * HIDDEN + 2 * HIDDEN * HIDDEN + HIDDEN * OUT_PAD)
    weight_bytes = (IN_PAD * HIDDEN + 2 * HIDDEN * HIDDEN + HIDDEN * OUT_PAD) * 2
    bytes_accessed = (feat.size * 4 + weight_bytes
                      + (3 * HIDDEN + OUT_PAD) * 4 + b_pad * OUT_PAD * 4)

    out = pl.pallas_call(
        _kitty_mlp_kernel,
        out_shape=jax.ShapeDtypeStruct((b_pad, OUT_PAD), jnp.float32),
        grid=grid,
        in_specs=[
            pl.BlockSpec((tb, IN_PAD), lambda i: (i, 0)),
            resident((IN_PAD, HIDDEN)), resident((1, HIDDEN)),
            resident((HIDDEN, HIDDEN)), resident((1, HIDDEN)),
            resident((HIDDEN, HIDDEN)), resident((1, HIDDEN)),
            resident((HIDDEN, OUT_PAD)), resident((1, OUT_PAD)),
        ],
        out_specs=pl.BlockSpec((tb, OUT_PAD), lambda i: (i, 0)),
        compiler_params=pltpu.CompilerParams(
            dimension_semantics=("parallel",)),
        cost_estimate=pl.CostEstimate(
            flops=flops,
            transcendentals=b_pad * (OUT_PAD + 1),
            bytes_accessed=bytes_accessed),
    )(feat,
      packed["w1"], packed["b1"],
      packed["w2"], packed["b2"],
      packed["w3"], packed["b3"],
      packed["w4"], packed["b4"])

    return out[:B, :OUT_DIM]


def _reference_forward(params, x, cards):
    """Pure-JAX f32 reference mirroring the PyTorch forward."""
    B = x.shape[0]
    card_emb = jnp.take(params["emb"], cards, axis=0).reshape(B, -1)
    h = jnp.concatenate([x, card_emb], axis=-1)
    h = jax.nn.relu(h @ params["w1"] + params["b1"])
    h = jax.nn.relu(h @ params["w2"] + params["b2"])
    h = jax.nn.relu(h @ params["w3"] + params["b3"])
    logits = h @ params["w4"] + params["b4"]
    return jax.nn.softmax(logits, axis=-1)


if __name__ == "__main__":
    key = jax.random.PRNGKey(0)
    kp, kx, kc = jax.random.split(key, 3)

    B = 2
    params = init_params(kp)
    packed = pack_params(params)
    x = jax.random.normal(kx, (B, OBS_DIM), jnp.float32)
    cards = jax.random.randint(kc, (B, N_CARDS), 0, EMB_VOCAB, jnp.int32)

    out = jax.block_until_ready(kitty_argmax_forward(packed, x, cards))
    ref = _reference_forward(params, x, cards)

    assert out.shape == (B, OUT_DIM)
    # bf16 matmul operands + approx reciprocal => looser tolerance than pure f32.
    assert jnp.allclose(out, ref, atol=3e-2, rtol=3e-2), "mismatch vs reference"
    assert jnp.allclose(jnp.sum(out, axis=-1), 1.0, atol=1e-2), "softmax rows must ~sum to 1"

    print("KERNEL_OK")
</pallas_src>

<mosaic_0001>
module attributes {stable_mosaic.version = 11 : i64} {
  func.func @_kitty_mlp_kernel(%arg0: i32, %arg1: memref<8x512xf32, #tpu.memory_space<vmem>>, %arg2: memref<512x256xbf16, #tpu.memory_space<vmem>>, %arg3: memref<1x256xf32, #tpu.memory_space<vmem>>, %arg4: memref<256x256xbf16, #tpu.memory_space<vmem>>, %arg5: memref<1x256xf32, #tpu.memory_space<vmem>>, %arg6: memref<256x256xbf16, #tpu.memory_space<vmem>>, %arg7: memref<1x256xf32, #tpu.memory_space<vmem>>, %arg8: memref<256x128xbf16, #tpu.memory_space<vmem>>, %arg9: memref<1x128xf32, #tpu.memory_space<vmem>>, %arg10: memref<8x128xf32, #tpu.memory_space<vmem>>) attributes {dimension_semantics = [#tpu.dimension_semantics<parallel>], iteration_bounds = array<i64: 1>, scalar_prefetch = 0 : i64, scratch_operands = 0 : i64, tpu.core_type = #tpu.core_type<tc>, window_params = [{transform_indices = @transform_0, window_bounds = array<i64: 8, 512>}, {pipeline_mode = #tpu.pipeline_mode<synchronous>, transform_indices = @transform_1, window_bounds = array<i64: 512, 256>}, {pipeline_mode = #tpu.pipeline_mode<synchronous>, transform_indices = @transform_2, window_bounds = array<i64: 1, 256>}, {pipeline_mode = #tpu.pipeline_mode<synchronous>, transform_indices = @transform_3, window_bounds = array<i64: 256, 256>}, {pipeline_mode = #tpu.pipeline_mode<synchronous>, transform_indices = @transform_4, window_bounds = array<i64: 1, 256>}, {pipeline_mode = #tpu.pipeline_mode<synchronous>, transform_indices = @transform_5, window_bounds = array<i64: 256, 256>}, {pipeline_mode = #tpu.pipeline_mode<synchronous>, transform_indices = @transform_6, window_bounds = array<i64: 1, 256>}, {pipeline_mode = #tpu.pipeline_mode<synchronous>, transform_indices = @transform_7, window_bounds = array<i64: 256, 128>}, {pipeline_mode = #tpu.pipeline_mode<synchronous>, transform_indices = @transform_8, window_bounds = array<i64: 1, 128>}, {transform_indices = @transform_9, window_bounds = array<i64: 8, 128>}]} {
    %c0 = arith.constant 0 : index
    %c0_0 = arith.constant 0 : index
    %0 = vector.load %arg1[%c0, %c0_0] : memref<8x512xf32, #tpu.memory_space<vmem>>, vector<8x512xf32>
    %1 = arith.truncf %0 : vector<8x512xf32> to vector<8x512xbf16>
    %c0_1 = arith.constant 0 : index
    %c0_2 = arith.constant 0 : index
    %2 = vector.load %arg2[%c0_1, %c0_2] : memref<512x256xbf16, #tpu.memory_space<vmem>>, vector<512x256xbf16>
    %cst = arith.constant dense<0.000000e+00> : vector<8x256xf32>
    %3 = tpu.matmul %1, %2, %cst {dimension_numbers = #tpu.dot_dimension_numbers<[1], [0], [0], [1], [0, 0, 1, 1], [], []>} : vector<8x512xbf16>, vector<512x256xbf16>, vector<8x256xf32> -> vector<8x256xf32>
    %c0_3 = arith.constant 0 : index
    %c0_4 = arith.constant 0 : index
    %4 = vector.load %arg3[%c0_3, %c0_4] : memref<1x256xf32, #tpu.memory_space<vmem>>, vector<1x256xf32>
    %5 = vector.broadcast %4 : vector<1x256xf32> to vector<8x256xf32>
    %6 = arith.addf %3, %5 : vector<8x256xf32>
    %cst_5 = arith.constant 0.000000e+00 : f32
    %7 = vector.broadcast %cst_5 : f32 to vector<8x256xf32>
    %8 = arith.maximumf %6, %7 : vector<8x256xf32>
    %9 = arith.truncf %8 : vector<8x256xf32> to vector<8x256xbf16>
    %c0_6 = arith.constant 0 : index
    %c0_7 = arith.constant 0 : index
    %10 = vector.load %arg4[%c0_6, %c0_7] : memref<256x256xbf16, #tpu.memory_space<vmem>>, vector<256x256xbf16>
    %cst_8 = arith.constant dense<0.000000e+00> : vector<8x256xf32>
    %11 = tpu.matmul %9, %10, %cst_8 {dimension_numbers = #tpu.dot_dimension_numbers<[1], [0], [0], [1], [0, 0, 1, 1], [], []>} : vector<8x256xbf16>, vector<256x256xbf16>, vector<8x256xf32> -> vector<8x256xf32>
    %c0_9 = arith.constant 0 : index
    %c0_10 = arith.constant 0 : index
    %12 = vector.load %arg5[%c0_9, %c0_10] : memref<1x256xf32, #tpu.memory_space<vmem>>, vector<1x256xf32>
    %13 = vector.broadcast %12 : vector<1x256xf32> to vector<8x256xf32>
    %14 = arith.addf %11, %13 : vector<8x256xf32>
    %cst_11 = arith.constant 0.000000e+00 : f32
    %15 = vector.broadcast %cst_11 : f32 to vector<8x256xf32>
    %16 = arith.maximumf %14, %15 : vector<8x256xf32>
    %17 = arith.truncf %16 : vector<8x256xf32> to vector<8x256xbf16>
    %c0_12 = arith.constant 0 : index
    %c0_13 = arith.constant 0 : index
    %18 = vector.load %arg6[%c0_12, %c0_13] : memref<256x256xbf16, #tpu.memory_space<vmem>>, vector<256x256xbf16>
    %cst_14 = arith.constant dense<0.000000e+00> : vector<8x256xf32>
    %19 = tpu.matmul %17, %18, %cst_14 {dimension_numbers = #tpu.dot_dimension_numbers<[1], [0], [0], [1], [0, 0, 1, 1], [], []>} : vector<8x256xbf16>, vector<256x256xbf16>, vector<8x256xf32> -> vector<8x256xf32>
    %c0_15 = arith.constant 0 : index
    %c0_16 = arith.constant 0 : index
    %20 = vector.load %arg7[%c0_15, %c0_16] : memref<1x256xf32, #tpu.memory_space<vmem>>, vector<1x256xf32>
    %21 = vector.broadcast %20 : vector<1x256xf32> to vector<8x256xf32>
    %22 = arith.addf %19, %21 : vector<8x256xf32>
    %cst_17 = arith.constant 0.000000e+00 : f32
    %23 = vector.broadcast %cst_17 : f32 to vector<8x256xf32>
    %24 = arith.maximumf %22, %23 : vector<8x256xf32>
    %25 = arith.truncf %24 : vector<8x256xf32> to vector<8x256xbf16>
    %c0_18 = arith.constant 0 : index
    %c0_19 = arith.constant 0 : index
    %26 = vector.load %arg8[%c0_18, %c0_19] : memref<256x128xbf16, #tpu.memory_space<vmem>>, vector<256x128xbf16>
    %cst_20 = arith.constant dense<0.000000e+00> : vector<8x128xf32>
    %27 = tpu.matmul %25, %26, %cst_20 {dimension_numbers = #tpu.dot_dimension_numbers<[1], [0], [0], [1], [0, 0, 1, 1], [], []>} : vector<8x256xbf16>, vector<256x128xbf16>, vector<8x128xf32> -> vector<8x128xf32>
    %c0_21 = arith.constant 0 : index
    %c0_22 = arith.constant 0 : index
    %28 = vector.load %arg9[%c0_21, %c0_22] : memref<1x128xf32, #tpu.memory_space<vmem>>, vector<1x128xf32>
    %29 = vector.broadcast %28 : vector<1x128xf32> to vector<8x128xf32>
    %30 = arith.addf %27, %29 : vector<8x128xf32>
    %cst_23 = arith.constant dense<0xFF800000> : vector<8xf32>
    %31 = vector.multi_reduction <maximumf>, %30, %cst_23 [1] : vector<8x128xf32> to vector<8xf32>
    %32 = vector.shape_cast %31 : vector<8xf32> to vector<8x1xf32>
    %33 = vector.broadcast %32 : vector<8x1xf32> to vector<8x128xf32>
    %34 = arith.subf %30, %33 : vector<8x128xf32>
    %35 = math.exp %34 : vector<8x128xf32>
    %cst_24 = arith.constant dense<0.000000e+00> : vector<8xf32>
    %36 = vector.multi_reduction <add>, %35, %cst_24 [1] : vector<8x128xf32> to vector<8xf32>
    %37 = vector.shape_cast %36 : vector<8xf32> to vector<8x1xf32>
    %38 = tpu.reciprocal %37 {approx = true} : vector<8x1xf32> -> vector<8x1xf32>
    %39 = vector.broadcast %38 : vector<8x1xf32> to vector<8x128xf32>
    %40 = arith.mulf %35, %39 : vector<8x128xf32>
    %c0_25 = arith.constant 0 : index
    %c0_26 = arith.constant 0 : index
    %41 = vector.load %arg10[%c0_25, %c0_26] : memref<8x128xf32, #tpu.memory_space<vmem>>, vector<8x128xf32>
    tpu.vector_store %arg10[%c0_25, %c0_26], %40 {strides = array<i32>} : memref<8x128xf32, #tpu.memory_space<vmem>>, vector<8x128xf32>,
    return
  }
  func.func @transform_0(%arg0: i32) -> (i32, i32) {
    %c0_i32 = arith.constant 0 : i32
    %c0_i32_0 = arith.constant 0 : i32
    return %arg0, %c0_i32 : i32, i32
  }
  func.func @transform_1(%arg0: i32) -> (i32, i32) {
    %c0_i32 = arith.constant 0 : i32
    %c0_i32_0 = arith.constant 0 : i32
    %c0_i32_1 = arith.constant 0 : i32
    return %c0_i32, %c0_i32_0 : i32, i32
  }
  func.func @transform_2(%arg0: i32) -> (i32, i32) {
    %c0_i32 = arith.constant 0 : i32
    %c0_i32_0 = arith.constant 0 : i32
    %c0_i32_1 = arith.constant 0 : i32
    return %c0_i32, %c0_i32_0 : i32, i32
  }
  func.func @transform_3(%arg0: i32) -> (i32, i32) {
    %c0_i32 = arith.constant 0 : i32
    %c0_i32_0 = arith.constant 0 : i32
    %c0_i32_1 = arith.constant 0 : i32
    return %c0_i32, %c0_i32_0 : i32, i32
  }
  func.func @transform_4(%arg0: i32) -> (i32, i32) {
    %c0_i32 = arith.constant 0 : i32
    %c0_i32_0 = arith.constant 0 : i32
    %c0_i32_1 = arith.constant 0 : i32
    return %c0_i32, %c0_i32_0 : i32, i32
  }
  func.func @transform_5(%arg0: i32) -> (i32, i32) {
    %c0_i32 = arith.constant 0 : i32
    %c0_i32_0 = arith.constant 0 : i32
    %c0_i32_1 = arith.constant 0 : i32
    return %c0_i32, %c0_i32_0 : i32, i32
  }
  func.func @transform_6(%arg0: i32) -> (i32, i32) {
    %c0_i32 = arith.constant 0 : i32
    %c0_i32_0 = arith.constant 0 : i32
    %c0_i32_1 = arith.constant 0 : i32
    return %c0_i32, %c0_i32_0 : i32, i32
  }
  func.func @transform_7(%arg0: i32) -> (i32, i32) {
    %c0_i32 = arith.constant 0 : i32
    %c0_i32_0 = arith.constant 0 : i32
    %c0_i32_1 = arith.constant 0 : i32
    return %c0_i32, %c0_i32_0 : i32, i32
  }
  func.func @transform_8(%arg0: i32) -> (i32, i32) {
    %c0_i32 = arith.constant 0 : i32
    %c0_i32_0 = arith.constant 0 : i32
    %c0_i32_1 = arith.constant 0 : i32
    return %c0_i32, %c0_i32_0 : i32, i32
  }
  func.func @transform_9(%arg0: i32) -> (i32, i32) {
    %c0_i32 = arith.constant 0 : i32
    %c0_i32_0 = arith.constant 0 : i32
    return %arg0, %c0_i32 : i32, i32
  }
}

</mosaic_0001>

<llo_original>
// kernel: kitty_argmax_forward.1
$region0: #{kitty_argmax_forward.1}
  #allocation0 [shape = 'u32[]', space=smem, size = 0x4, offset = 0x4, fixed_abs, tag = 'smem constant byte address 0x4 - core index']
  #allocation1 [shape = 'u32[144,128]{1,0:T(1,128)}', space=vmem, size = 0x12000, scoped, tag = 'internal scratch']
  %s0 = inlined_call_operand.vmem [shape: f32[8,512], index: 0, kind: input, shape index: {}]
  %s1 = inlined_call_operand.vmem [shape: bf16[512,256], index: 1, kind: input, shape index: {}]
  %s2 = inlined_call_operand.vmem [shape: f32[1,256], index: 2, kind: input, shape index: {}]
  %s3 = inlined_call_operand.vmem [shape: bf16[256,256], index: 3, kind: input, shape index: {}]
  %s4 = inlined_call_operand.vmem [shape: f32[1,256], index: 4, kind: input, shape index: {}]
  %s5 = inlined_call_operand.vmem [shape: bf16[256,256], index: 5, kind: input, shape index: {}]
  %s6 = inlined_call_operand.vmem [shape: f32[1,256], index: 6, kind: input, shape index: {}]
  %s7 = inlined_call_operand.vmem [shape: bf16[256,128], index: 7, kind: input, shape index: {}]
  %s8 = inlined_call_operand.vmem [shape: f32[1,128], index: 8, kind: input, shape index: {}]
  %s9 = inlined_call_operand.vmem [shape: f32[8,128], index: 9, kind: output, shape index: {}]
  %s10 = sld [smem:[#allocation0]]
  $region46: #{kitty_argmax_forward.1} parent=0
    _
  %s12 = ssub.s32 1, %s10
  %s13 = scalar_select 0, %s12, %s10
  // Predicated region
  $region2: #{kitty_argmax_forward.1} parent=0 // pred_check
    _
  $region3: #{kitty_argmax_forward.1} parent=0 // pred_check_branch
    %15 = sbr.rel (0) target = $region5
  $region4: #{kitty_argmax_forward.1} parent=0 // pred_region
    _
  $region5: #{kitty_argmax_forward.1} parent=0 // pred_fallthru
    _
  // Predicated region
  $region6: #{kitty_argmax_forward.1} parent=0 // pred_check
    _
  $region7: #{kitty_argmax_forward.1} parent=0 // pred_check_branch
    %17 = sbr.rel (0) target = $region9
  $region8: #{kitty_argmax_forward.1} parent=0 // pred_region
    _
  $region9: #{kitty_argmax_forward.1} parent=0 // pred_fallthru
    _
  // Predicated region
  $region10: #{kitty_argmax_forward.1} parent=0 // pred_check
    _
  $region11: #{kitty_argmax_forward.1} parent=0 // pred_check_branch
    %19 = sbr.rel (0) target = $region13
  $region12: #{kitty_argmax_forward.1} parent=0 // pred_region
    _
  $region13: #{kitty_argmax_forward.1} parent=0 // pred_fallthru
    _
  // Predicated region
  $region14: #{kitty_argmax_forward.1} parent=0 // pred_check
    _
  $region15: #{kitty_argmax_forward.1} parent=0 // pred_check_branch
    %21 = sbr.rel (0) target = $region17
  $region16: #{kitty_argmax_forward.1} parent=0 // pred_region
    _
  $region17: #{kitty_argmax_forward.1} parent=0 // pred_fallthru
    _
  // Predicated region
  $region18: #{kitty_argmax_forward.1} parent=0 // pred_check
    _
  $region19: #{kitty_argmax_forward.1} parent=0 // pred_check_branch
    %23 = sbr.rel (0) target = $region21
  $region20: #{kitty_argmax_forward.1} parent=0 // pred_region
    _
  $region21: #{kitty_argmax_forward.1} parent=0 // pred_fallthru
    _
  // Predicated region
  $region22: #{kitty_argmax_forward.1} parent=0 // pred_check
    _
  $region23: #{kitty_argmax_forward.1} parent=0 // pred_check_branch
    %25 = sbr.rel (0) target = $region25
  $region24: #{kitty_argmax_forward.1} parent=0 // pred_region
    _
  $region25: #{kitty_argmax_forward.1} parent=0 // pred_fallthru
    _
  // Predicated region
  $region26: #{kitty_argmax_forward.1} parent=0 // pred_check
    _
  $region27: #{kitty_argmax_forward.1} parent=0 // pred_check_branch
    %27 = sbr.rel (0) target = $region29
  $region28: #{kitty_argmax_forward.1} parent=0 // pred_region
    _
  $region29: #{kitty_argmax_forward.1} parent=0 // pred_fallthru
    _
  // Predicated region
  $region30: #{kitty_argmax_forward.1} parent=0 // pred_check
    _
  $region31: #{kitty_argmax_forward.1} parent=0 // pred_check_branch
    %29 = sbr.rel (0) target = $region33
  $region32: #{kitty_argmax_forward.1} parent=0 // pred_region
    _
  $region33: #{kitty_argmax_forward.1} parent=0 // pred_fallthru
    _
  // Predicated region
  $region34: #{kitty_argmax_forward.1} parent=0 // pred_check
    _
  $region35: #{kitty_argmax_forward.1} parent=0 // pred_check_branch
    %31 = sbr.rel (0) target = $region37
  $region36: #{kitty_argmax_forward.1} parent=0 // pred_region
    _
  $region37: #{kitty_argmax_forward.1} parent=0 // pred_fallthru
    _
  %v33 = vld [vmem:[%s0] sm:$0xff]
  %v34 = vld [vmem:[%s0 + $0x8] sm:$0xff]
  %v35 = vld [vmem:[%s0 + $0x10] sm:$0xff]
  %v36 = vld [vmem:[%s0 + $0x18] sm:$0xff]
  %v37 = vpack.c.bf16 %v33, %v33
  %v38 = vpack.c.bf16 %v34, %v34
  %v39 = vpack.c.bf16 %v35, %v35
  %v40 = vpack.c.bf16 %v36, %v36
  %v41 = vld [vmem:[%s1] sm:$0xff]
  %v42 = vld [vmem:[%s1 + $0x8] sm:$0xff]
  %v43 = vld [vmem:[%s1 + $0x10] sm:$0xff]
  %v44 = vld [vmem:[%s1 + $0x18] sm:$0xff]
  %v45 = vld [vmem:[%s1 + $0x20] sm:$0xff]
  %v46 = vld [vmem:[%s1 + $0x28] sm:$0xff]
  %v47 = vld [vmem:[%s1 + $0x30] sm:$0xff]
  %v48 = vld [vmem:[%s1 + $0x38] sm:$0xff]
  %v49 = vld [vmem:[%s1 + $0x40] sm:$0xff]
  %v50 = vld [vmem:[%s1 + $0x48] sm:$0xff]
  %v51 = vld [vmem:[%s1 + $0x50] sm:$0xff]
  %v52 = vld [vmem:[%s1 + $0x58] sm:$0xff]
  %v53 = vld [vmem:[%s1 + $0x60] sm:$0xff]
  %v54 = vld [vmem:[%s1 + $0x68] sm:$0xff]
  %v55 = vld [vmem:[%s1 + $0x70] sm:$0xff]
  %v56 = vld [vmem:[%s1 + $0x78] sm:$0xff]
  %v57 = vld [vmem:[%s1 + $0x80] sm:$0xff]
  %v58 = vld [vmem:[%s1 + $0x88] sm:$0xff]
  %v59 = vld [vmem:[%s1 + $0x90] sm:$0xff]
  %v60 = vld [vmem:[%s1 + $0x98] sm:$0xff]
  %v61 = vld [vmem:[%s1 + $0xa0] sm:$0xff]
  %v62 = vld [vmem:[%s1 + $0xa8] sm:$0xff]
  %v63 = vld [vmem:[%s1 + $0xb0] sm:$0xff]
  %v64 = vld [vmem:[%s1 + $0xb8] sm:$0xff]
  %v65 = vld [vmem:[%s1 + $0xc0] sm:$0xff]
  %v66 = vld [vmem:[%s1 + $0xc8] sm:$0xff]
  %v67 = vld [vmem:[%s1 + $0xd0] sm:$0xff]
  %v68 = vld [vmem:[%s1 + $0xd8] sm:$0xff]
  %v69 = vld [vmem:[%s1 + $0xe0] sm:$0xff]
  %v70 = vld [vmem:[%s1 + $0xe8] sm:$0xff]
  %v71 = vld [vmem:[%s1 + $0xf0] sm:$0xff]
  %v72 = vld [vmem:[%s1 + $0xf8] sm:$0xff]
  %v73 = vld [vmem:[%s1 + $0x100] sm:$0xff]
  %v74 = vld [vmem:[%s1 + $0x108] sm:$0xff]
  %v75 = vld [vmem:[%s1 + $0x110] sm:$0xff]
  %v76 = vld [vmem:[%s1 + $0x118] sm:$0xff]
  %v77 = vld [vmem:[%s1 + $0x120] sm:$0xff]
  %v78 = vld [vmem:[%s1 + $0x128] sm:$0xff]
  %v79 = vld [vmem:[%s1 + $0x130] sm:$0xff]
  %v80 = vld [vmem:[%s1 + $0x138] sm:$0xff]
  %v81 = vld [vmem:[%s1 + $0x140] sm:$0xff]
  %v82 = vld [vmem:[%s1 + $0x148] sm:$0xff]
  %v83 = vld [vmem:[%s1 + $0x150] sm:$0xff]
  %v84 = vld [vmem:[%s1 + $0x158] sm:$0xff]
  %v85 = vld [vmem:[%s1 + $0x160] sm:$0xff]
  %v86 = vld [vmem:[%s1 + $0x168] sm:$0xff]
  %v87 = vld [vmem:[%s1 + $0x170] sm:$0xff]
  %v88 = vld [vmem:[%s1 + $0x178] sm:$0xff]
  %v89 = vld [vmem:[%s1 + $0x180] sm:$0xff]
  %v90 = vld [vmem:[%s1 + $0x188] sm:$0xff]
  %v91 = vld [vmem:[%s1 + $0x190] sm:$0xff]
  %v92 = vld [vmem:[%s1 + $0x198] sm:$0xff]
  %v93 = vld [vmem:[%s1 + $0x1a0] sm:$0xff]
  %v94 = vld [vmem:[%s1 + $0x1a8] sm:$0xff]
  %v95 = vld [vmem:[%s1 + $0x1b0] sm:$0xff]
  %v96 = vld [vmem:[%s1 + $0x1b8] sm:$0xff]
  %v97 = vld [vmem:[%s1 + $0x1c0] sm:$0xff]
  %v98 = vld [vmem:[%s1 + $0x1c8] sm:$0xff]
  %v99 = vld [vmem:[%s1 + $0x1d0] sm:$0xff]
  %v100 = vld [vmem:[%s1 + $0x1d8] sm:$0xff]
  %v101 = vld [vmem:[%s1 + $0x1e0] sm:$0xff]
  %v102 = vld [vmem:[%s1 + $0x1e8] sm:$0xff]
  %v103 = vld [vmem:[%s1 + $0x1f0] sm:$0xff]
  %v104 = vld [vmem:[%s1 + $0x1f8] sm:$0xff]
  %v105 = vld [vmem:[%s2] sm:$0x3]
  %v107 = vlaneseq
  %v108 = vshrl.u32 %v107, 7
  %v109 = vsub.s32 0, %v108
  %v110 = vrot.slane %v105, %v109
  %v111 = vlaneseq
  %v112 = vshrl.u32 %v111, 7
  %v113 = vsub.s32 1, %v112
  %v114 = vrot.slane %v105, %v113
  %v181 = vunpack.c.l.b16 %v41
  %v182 = vunpack.c.h.b16 %v41
  %v183 = vunpack.c.l.b16 %v42
  %v184 = vunpack.c.h.b16 %v42
  %v185 = vunpack.c.l.b16 %v43
  %v186 = vunpack.c.h.b16 %v43
  %v187 = vunpack.c.l.b16 %v44
  %v188 = vunpack.c.h.b16 %v44
  %v189 = vunpack.c.l.b16 %v45
  %v190 = vunpack.c.h.b16 %v45
  %v191 = vunpack.c.l.b16 %v46
  %v192 = vunpack.c.h.b16 %v46
  %v193 = vunpack.c.l.b16 %v47
  %v194 = vunpack.c.h.b16 %v47
  %v195 = vunpack.c.l.b16 %v48
  %v196 = vunpack.c.h.b16 %v48
  %v197 = vunpack.c.l.b16 %v49
  %v198 = vunpack.c.h.b16 %v49
  %v199 = vunpack.c.l.b16 %v50
  %v200 = vunpack.c.h.b16 %v50
  %v201 = vunpack.c.l.b16 %v51
  %v202 = vunpack.c.h.b16 %v51
  %v203 = vunpack.c.l.b16 %v52
  %v204 = vunpack.c.h.b16 %v52
  %v205 = vunpack.c.l.b16 %v53
  %v206 = vunpack.c.h.b16 %v53
  %v207 = vunpack.c.l.b16 %v54
  %v208 = vunpack.c.h.b16 %v54
  %v209 = vunpack.c.l.b16 %v55
  %v210 = vunpack.c.h.b16 %v55
  %v211 = vunpack.c.l.b16 %v56
  %v212 = vunpack.c.h.b16 %v56
  %v213 = vunpack.c.l.b16 %v57
  %v214 = vunpack.c.h.b16 %v57
  %v215 = vunpack.c.l.b16 %v58
  %v216 = vunpack.c.h.b16 %v58
  %v217 = vunpack.c.l.b16 %v59
  %v218 = vunpack.c.h.b16 %v59
  %v219 = vunpack.c.l.b16 %v60
  %v220 = vunpack.c.h.b16 %v60
  %v221 = vunpack.c.l.b16 %v61
  %v222 = vunpack.c.h.b16 %v61
  %v223 = vunpack.c.l.b16 %v62
  %v224 = vunpack.c.h.b16 %v62
  %v225 = vunpack.c.l.b16 %v63
  %v226 = vunpack.c.h.b16 %v63
  %v227 = vunpack.c.l.b16 %v64
  %v228 = vunpack.c.h.b16 %v64
  %v229 = vunpack.c.l.b16 %v65
  %v230 = vunpack.c.h.b16 %v65
  %v231 = vunpack.c.l.b16 %v66
  %v232 = vunpack.c.h.b16 %v66
  %v233 = vunpack.c.l.b16 %v67
  %v234 = vunpack.c.h.b16 %v67
  %v235 = vunpack.c.l.b16 %v68
  %v236 = vunpack.c.h.b16 %v68
  %v237 = vunpack.c.l.b16 %v69
  %v238 = vunpack.c.h.b16 %v69
  %v239 = vunpack.c.l.b16 %v70
  %v240 = vunpack.c.h.b16 %v70
  %v241 = vunpack.c.l.b16 %v71
  %v242 = vunpack.c.h.b16 %v71
  %v243 = vunpack.c.l.b16 %v72
  %v244 = vunpack.c.h.b16 %v72
  %v245 = vunpack.c.l.b16 %v73
  %v246 = vunpack.c.h.b16 %v73
  %v247 = vunpack.c.l.b16 %v74
  %v248 = vunpack.c.h.b16 %v74
  %v249 = vunpack.c.l.b16 %v75
  %v250 = vunpack.c.h.b16 %v75
  %v251 = vunpack.c.l.b16 %v76
  %v252 = vunpack.c.h.b16 %v76
  %v253 = vunpack.c.l.b16 %v77
  %v254 = vunpack.c.h.b16 %v77
  %v255 = vunpack.c.l.b16 %v78
  %v256 = vunpack.c.h.b16 %v78
  %v257 = vunpack.c.l.b16 %v79
  %v258 = vunpack.c.h.b16 %v79
  %v259 = vunpack.c.l.b16 %v80
  %v260 = vunpack.c.h.b16 %v80
  %v261 = vunpack.c.l.b16 %v81
  %v262 = vunpack.c.h.b16 %v81
  %v263 = vunpack.c.l.b16 %v82
  %v264 = vunpack.c.h.b16 %v82
  %v265 = vunpack.c.l.b16 %v83
  %v266 = vunpack.c.h.b16 %v83
  %v267 = vunpack.c.l.b16 %v84
  %v268 = vunpack.c.h.b16 %v84
  %v269 = vunpack.c.l.b16 %v85
  %v270 = vunpack.c.h.b16 %v85
  %v271 = vunpack.c.l.b16 %v86
  %v272 = vunpack.c.h.b16 %v86
  %v273 = vunpack.c.l.b16 %v87
  %v274 = vunpack.c.h.b16 %v87
  %v275 = vunpack.c.l.b16 %v88
  %v276 = vunpack.c.h.b16 %v88
  %v277 = vunpack.c.l.b16 %v89
  %v278 = vunpack.c.h.b16 %v89
  %v279 = vunpack.c.l.b16 %v90
  %v280 = vunpack.c.h.b16 %v90
  %v281 = vunpack.c.l.b16 %v91
  %v282 = vunpack.c.h.b16 %v91
  %v283 = vunpack.c.l.b16 %v92
  %v284 = vunpack.c.h.b16 %v92
  %v285 = vunpack.c.l.b16 %v93
  %v286 = vunpack.c.h.b16 %v93
  %v287 = vunpack.c.l.b16 %v94
  %v288 = vunpack.c.h.b16 %v94
  %v289 = vunpack.c.l.b16 %v95
  %v290 = vunpack.c.h.b16 %v95
  %v291 = vunpack.c.l.b16 %v96
  %v292 = vunpack.c.h.b16 %v96
  %v293 = vunpack.c.l.b16 %v97
  %v294 = vunpack.c.h.b16 %v97
  %v295 = vunpack.c.l.b16 %v98
  %v296 = vunpack.c.h.b16 %v98
  %v297 = vunpack.c.l.b16 %v99
  %v298 = vunpack.c.h.b16 %v99
  %v299 = vunpack.c.l.b16 %v100
  %v300 = vunpack.c.h.b16 %v100
  %v301 = vunpack.c.l.b16 %v101
  %v302 = vunpack.c.h.b16 %v101
  %v303 = vunpack.c.l.b16 %v102
  %v304 = vunpack.c.h.b16 %v102
  %v305 = vunpack.c.l.b16 %v103
  %v306 = vunpack.c.h.b16 %v103
  %v307 = vunpack.c.l.b16 %v104
  %v308 = vunpack.c.h.b16 %v104
  %v309 = vpack.c.b16 %v183, %v181
  %v310 = vpack.c.b16 %v184, %v182
  %v311 = vpack.c.b16 %v187, %v185
  %v312 = vpack.c.b16 %v188, %v186
  %v313 = vpack.c.b16 %v191, %v189
  %v314 = vpack.c.b16 %v192, %v190
  %v315 = vpack.c.b16 %v195, %v193
  %v316 = vpack.c.b16 %v196, %v194
  %v317 = vpack.c.b16 %v199, %v197
  %v318 = vpack.c.b16 %v200, %v198
  %v319 = vpack.c.b16 %v203, %v201
  %v320 = vpack.c.b16 %v204, %v202
  %v321 = vpack.c.b16 %v207, %v205
  %v322 = vpack.c.b16 %v208, %v206
  %v323 = vpack.c.b16 %v211, %v209
  %v324 = vpack.c.b16 %v212, %v210
  %v325 = vpack.c.b16 %v215, %v213
  %v326 = vpack.c.b16 %v216, %v214
  %v327 = vpack.c.b16 %v219, %v217
  %v328 = vpack.c.b16 %v220, %v218
  %v329 = vpack.c.b16 %v223, %v221
  %v330 = vpack.c.b16 %v224, %v222
  %v331 = vpack.c.b16 %v227, %v225
  %v332 = vpack.c.b16 %v228, %v226
  %v333 = vpack.c.b16 %v231, %v229
  %v334 = vpack.c.b16 %v232, %v230
  %v335 = vpack.c.b16 %v235, %v233
  %v336 = vpack.c.b16 %v236, %v234
  %v337 = vpack.c.b16 %v239, %v237
  %v338 = vpack.c.b16 %v240, %v238
  %v339 = vpack.c.b16 %v243, %v241
  %v340 = vpack.c.b16 %v244, %v242
  %v341 = vpack.c.b16 %v247, %v245
  %v342 = vpack.c.b16 %v248, %v246
  %v343 = vpack.c.b16 %v251, %v249
  %v344 = vpack.c.b16 %v252, %v250
  %v345 = vpack.c.b16 %v255, %v253
  %v346 = vpack.c.b16 %v256, %v254
  %v347 = vpack.c.b16 %v259, %v257
  %v348 = vpack.c.b16 %v260, %v258
  %v349 = vpack.c.b16 %v263, %v261
  %v350 = vpack.c.b16 %v264, %v262
  %v351 = vpack.c.b16 %v267, %v265
  %v352 = vpack.c.b16 %v268, %v266
  %v353 = vpack.c.b16 %v271, %v269
  %v354 = vpack.c.b16 %v272, %v270
  %v355 = vpack.c.b16 %v275, %v273
  %v356 = vpack.c.b16 %v276, %v274
  %v357 = vpack.c.b16 %v279, %v277
  %v358 = vpack.c.b16 %v280, %v278
  %v359 = vpack.c.b16 %v283, %v281
  %v360 = vpack.c.b16 %v284, %v282
  %v361 = vpack.c.b16 %v287, %v285
  %v362 = vpack.c.b16 %v288, %v286
  %v363 = vpack.c.b16 %v291, %v289
  %v364 = vpack.c.b16 %v292, %v290
  %v365 = vpack.c.b16 %v295, %v293
  %v366 = vpack.c.b16 %v296, %v294
  %v367 = vpack.c.b16 %v299, %v297
  %v368 = vpack.c.b16 %v300, %v298
  %v369 = vpack.c.b16 %v303, %v301
  %v370 = vpack.c.b16 %v304, %v302
  %v371 = vpack.c.b16 %v307, %v305
  %v372 = vpack.c.b16 %v308, %v306
  %437 = vmatprep.subr.bf16.mxu0 %v310
  %438 = vmatpush1.bf16.msra.mxu0 %v309
  %439 = vmatprep.subr.bf16.mxu0 %v312
  %440 = vmatpush1.bf16.msra.mxu0 %v311
  %441 = vmatprep.subr.bf16.mxu0 %v314
  %442 = vmatpush1.bf16.msra.mxu0 %v313
  %443 = vmatprep.subr.bf16.mxu0 %v316
  %444 = vmatpush1.bf16.msra.mxu0 %v315
  %445 = vmatprep.subr.bf16.mxu0 %v318
  %446 = vmatpush1.bf16.msra.mxu0 %v317
  %447 = vmatprep.subr.bf16.mxu0 %v320
  %448 = vmatpush1.bf16.msra.mxu0 %v319
  %449 = vmatprep.subr.bf16.mxu0 %v322
  %450 = vmatpush1.bf16.msra.mxu0 %v321
  %451 = vmatprep.subr.bf16.mxu0 %v324
  %452 = vmatpush1.bf16.msra.mxu0 %v323
  %453 = vmatprep.subr.bf16.mxu0 %v326
  %454 = vmatpush1.bf16.msra.mxu0 %v325
  %455 = vmatprep.subr.bf16.mxu0 %v328
  %456 = vmatpush1.bf16.msra.mxu0 %v327
  %457 = vmatprep.subr.bf16.mxu0 %v330
  %458 = vmatpush1.bf16.msra.mxu0 %v329
  %459 = vmatprep.subr.bf16.mxu0 %v332
  %460 = vmatpush1.bf16.msra.mxu0 %v331
  %461 = vmatprep.subr.bf16.mxu0 %v334
  %462 = vmatpush1.bf16.msra.mxu0 %v333
  %463 = vmatprep.subr.bf16.mxu0 %v336
  %464 = vmatpush1.bf16.msra.mxu0 %v335
  %465 = vmatprep.subr.bf16.mxu0 %v338
  %466 = vmatpush1.bf16.msra.mxu0 %v337
  %467 = vmatprep.subr.bf16.mxu0 %v340
  %468 = vmatpush1.bf16.msra.mxu0 %v339
  %469 = vmatprep.mubr.bf16.mxu0 %v38
  %470 = vmatmul.mubr.bf16.gmra.mrb[0].mxu0 %v37
  %v471 = vpop.f32.mrb[0].mxu0
  %v472 = vadd.f32 %v110, %v471
  %v473 = vpop.f32.mrb[0].mxu0
  %v474 = vadd.f32 %v114, %v473
  %v475 = vpop.f32.mrb[0].mxu0
  %v476 = vpop.f32.mrb[0].mxu0
  %477 = vdwg.mxu0
  %478 = vmatprep.subr.bf16.mxu0 %v342
  %479 = vmatpush1.bf16.msra.mxu0 %v341
  %480 = vmatprep.subr.bf16.mxu0 %v344
  %481 = vmatpush1.bf16.msra.mxu0 %v343
  %482 = vmatprep.subr.bf16.mxu0 %v346
  %483 = vmatpush1.bf16.msra.mxu0 %v345
  %484 = vmatprep.subr.bf16.mxu0 %v348
  %485 = vmatpush1.bf16.msra.mxu0 %v347
  %486 = vmatprep.subr.bf16.mxu0 %v350
  %487 = vmatpush1.bf16.msra.mxu0 %v349
  %488 = vmatprep.subr.bf16.mxu0 %v352
  %489 = vmatpush1.bf16.msra.mxu0 %v351
  %490 = vmatprep.subr.bf16.mxu0 %v354
  %491 = vmatpush1.bf16.msra.mxu0 %v353
  %492 = vmatprep.subr.bf16.mxu0 %v356
  %493 = vmatpush1.bf16.msra.mxu0 %v355
  %494 = vmatprep.subr.bf16.mxu0 %v358
  %495 = vmatpush1.bf16.msra.mxu0 %v357
  %496 = vmatprep.subr.bf16.mxu0 %v360
  %497 = vmatpush1.bf16.msra.mxu0 %v359
  %498 = vmatprep.subr.bf16.mxu0 %v362
  %499 = vmatpush1.bf16.msra.mxu0 %v361
  %500 = vmatprep.subr.bf16.mxu0 %v364
  %501 = vmatpush1.bf16.msra.mxu0 %v363
  %502 = vmatprep.subr.bf16.mxu0 %v366
  %503 = vmatpush1.bf16.msra.mxu0 %v365
  %504 = vmatprep.subr.bf16.mxu0 %v368
  %505 = vmatpush1.bf16.msra.mxu0 %v367
  %506 = vmatprep.subr.bf16.mxu0 %v370
  %507 = vmatpush1.bf16.msra.mxu0 %v369
  %508 = vmatprep.subr.bf16.mxu0 %v372
  %509 = vmatpush1.bf16.msra.mxu0 %v371
  %510 = vmatprep.mubr.bf16.mxu0 %v40
  %511 = vmatmul.mubr.bf16.gmra.mrb[0].mxu0 %v39
  %v512 = vpop.f32.mrb[0].mxu0
  %v513 = vadd.f32 %v472, %v512
  %v514 = vpop.f32.mrb[0].mxu0
  %v515 = vadd.f32 %v474, %v514
  %v516 = vpop.f32.mrb[0].mxu0
  %v517 = vpop.f32.mrb[0].mxu0
  %518 = vdwg.mxu0
  %v519 = vmax.f32 %v513, 0.0
  %v520 = vmax.f32 %v515, 0.0
  %v521 = vpack.c.bf16 %v519, %v519
  %v522 = vpack.c.bf16 %v520, %v520
  %v523 = vld [vmem:[%s3] sm:$0xff]
  %v524 = vld [vmem:[%s3 + $0x8] sm:$0xff]
  %v525 = vld [vmem:[%s3 + $0x10] sm:$0xff]
  %v526 = vld [vmem:[%s3 + $0x18] sm:$0xff]
  %v527 = vld [vmem:[%s3 + $0x20] sm:$0xff]
  %v528 = vld [vmem:[%s3 + $0x28] sm:$0xff]
  %v529 = vld [vmem:[%s3 + $0x30] sm:$0xff]
  %v530 = vld [vmem:[%s3 + $0x38] sm:$0xff]
  %v531 = vld [vmem:[%s3 + $0x40] sm:$0xff]
  %v532 = vld [vmem:[%s3 + $0x48] sm:$0xff]
  %v533 = vld [vmem:[%s3 + $0x50] sm:$0xff]
  %v534 = vld [vmem:[%s3 + $0x58] sm:$0xff]
  %v535 = vld [vmem:[%s3 + $0x60] sm:$0xff]
  %v536 = vld [vmem:[%s3 + $0x68] sm:$0xff]
  %v537 = vld [vmem:[%s3 + $0x70] sm:$0xff]
  %v538 = vld [vmem:[%s3 + $0x78] sm:$0xff]
  %v539 = vld [vmem:[%s3 + $0x80] sm:$0xff]
  %v540 = vld [vmem:[%s3 + $0x88] sm:$0xff]
  %v541 = vld [vmem:[%s3 + $0x90] sm:$0xff]
  %v542 = vld [vmem:[%s3 + $0x98] sm:$0xff]
  %v543 = vld [vmem:[%s3 + $0xa0] sm:$0xff]
  %v544 = vld [vmem:[%s3 + $0xa8] sm:$0xff]
  %v545 = vld [vmem:[%s3 + $0xb0] sm:$0xff]
  %v546 = vld [vmem:[%s3 + $0xb8] sm:$0xff]
  %v547 = vld [vmem:[%s3 + $0xc0] sm:$0xff]
  %v548 = vld [vmem:[%s3 + $0xc8] sm:$0xff]
  %v549 = vld [vmem:[%s3 + $0xd0] sm:$0xff]
  %v550 = vld [vmem:[%s3 + $0xd8] sm:$0xff]
  %v551 = vld [vmem:[%s3 + $0xe0] sm:$0xff]
  %v552 = vld [vmem:[%s3 + $0xe8] sm:$0xff]
  %v553 = vld [vmem:[%s3 + $0xf0] sm:$0xff]
  %v554 = vld [vmem:[%s3 + $0xf8] sm:$0xff]
  %v555 = vld [vmem:[%s4] sm:$0x3]
  %v557 = vlaneseq
  %v558 = vshrl.u32 %v557, 7
  %v559 = vsub.s32 0, %v558
  %v560 = vrot.slane %v555, %v559
  %v561 = vlaneseq
  %v562 = vshrl.u32 %v561, 7
  %v563 = vsub.s32 1, %v562
  %v564 = vrot.slane %v555, %v563
  %v599 = vunpack.c.l.b16 %v523
  %v600 = vunpack.c.h.b16 %v523
  %v601 = vunpack.c.l.b16 %v524
  %v602 = vunpack.c.h.b16 %v524
  %v603 = vunpack.c.l.b16 %v525
  %v604 = vunpack.c.h.b16 %v525
  %v605 = vunpack.c.l.b16 %v526
  %v606 = vunpack.c.h.b16 %v526
  %v607 = vunpack.c.l.b16 %v527
  %v608 = vunpack.c.h.b16 %v527
  %v609 = vunpack.c.l.b16 %v528
  %v610 = vunpack.c.h.b16 %v528
  %v611 = vunpack.c.l.b16 %v529
  %v612 = vunpack.c.h.b16 %v529
  %v613 = vunpack.c.l.b16 %v530
  %v614 = vunpack.c.h.b16 %v530
  %v615 = vunpack.c.l.b16 %v531
  %v616 = vunpack.c.h.b16 %v531
  %v617 = vunpack.c.l.b16 %v532
  %v618 = vunpack.c.h.b16 %v532
  %v619 = vunpack.c.l.b16 %v533
  %v620 = vunpack.c.h.b16 %v533
  %v621 = vunpack.c.l.b16 %v534
  %v622 = vunpack.c.h.b16 %v534
  %v623 = vunpack.c.l.b16 %v535
  %v624 = vunpack.c.h.b16 %v535
  %v625 = vunpack.c.l.b16 %v536
  %v626 = vunpack.c.h.b16 %v536
  %v627 = vunpack.c.l.b16 %v537
  %v628 = vunpack.c.h.b16 %v537
  %v629 = vunpack.c.l.b16 %v538
  %v630 = vunpack.c.h.b16 %v538
  %v631 = vunpack.c.l.b16 %v539
  %v632 = vunpack.c.h.b16 %v539
  %v633 = vunpack.c.l.b16 %v540
  %v634 = vunpack.c.h.b16 %v540
  %v635 = vunpack.c.l.b16 %v541
  %v636 = vunpack.c.h.b16 %v541
  %v637 = vunpack.c.l.b16 %v542
  %v638 = vunpack.c.h.b16 %v542
  %v639 = vunpack.c.l.b16 %v543
  %v640 = vunpack.c.h.b16 %v543
  %v641 = vunpack.c.l.b16 %v544
  %v642 = vunpack.c.h.b16 %v544
  %v643 = vunpack.c.l.b16 %v545
  %v644 = vunpack.c.h.b16 %v545
  %v645 = vunpack.c.l.b16 %v546
  %v646 = vunpack.c.h.b16 %v546
  %v647 = vunpack.c.l.b16 %v547
  %v648 = vunpack.c.h.b16 %v547
  %v649 = vunpack.c.l.b16 %v548
  %v650 = vunpack.c.h.b16 %v548
  %v651 = vunpack.c.l.b16 %v549
  %v652 = vunpack.c.h.b16 %v549
  %v653 = vunpack.c.l.b16 %v550
  %v654 = vunpack.c.h.b16 %v550
  %v655 = vunpack.c.l.b16 %v551
  %v656 = vunpack.c.h.b16 %v551
  %v657 = vunpack.c.l.b16 %v552
  %v658 = vunpack.c.h.b16 %v552
  %v659 = vunpack.c.l.b16 %v553
  %v660 = vunpack.c.h.b16 %v553
  %v661 = vunpack.c.l.b16 %v554
  %v662 = vunpack.c.h.b16 %v554
  %v663 = vpack.c.b16 %v601, %v599
  %v664 = vpack.c.b16 %v602, %v600
  %v665 = vpack.c.b16 %v605, %v603
  %v666 = vpack.c.b16 %v606, %v604
  %v667 = vpack.c.b16 %v609, %v607
  %v668 = vpack.c.b16 %v610, %v608
  %v669 = vpack.c.b16 %v613, %v611
  %v670 = vpack.c.b16 %v614, %v612
  %v671 = vpack.c.b16 %v617, %v615
  %v672 = vpack.c.b16 %v618, %v616
  %v673 = vpack.c.b16 %v621, %v619
  %v674 = vpack.c.b16 %v622, %v620
  %v675 = vpack.c.b16 %v625, %v623
  %v676 = vpack.c.b16 %v626, %v624
  %v677 = vpack.c.b16 %v629, %v627
  %v678 = vpack.c.b16 %v630, %v628
  %v679 = vpack.c.b16 %v633, %v631
  %v680 = vpack.c.b16 %v634, %v632
  %v681 = vpack.c.b16 %v637, %v635
  %v682 = vpack.c.b16 %v638, %v636
  %v683 = vpack.c.b16 %v641, %v639
  %v684 = vpack.c.b16 %v642, %v640
  %v685 = vpack.c.b16 %v645, %v643
  %v686 = vpack.c.b16 %v646, %v644
  %v687 = vpack.c.b16 %v649, %v647
  %v688 = vpack.c.b16 %v650, %v648
  %v689 = vpack.c.b16 %v653, %v651
  %v690 = vpack.c.b16 %v654, %v652
  %v691 = vpack.c.b16 %v657, %v655
  %v692 = vpack.c.b16 %v658, %v656
  %v693 = vpack.c.b16 %v661, %v659
  %v694 = vpack.c.b16 %v662, %v660
  %727 = vmatprep.subr.bf16.mxu0 %v664
  %728 = vmatpush1.bf16.msra.mxu0 %v663
  %729 = vmatprep.subr.bf16.mxu0 %v666
  %730 = vmatpush1.bf16.msra.mxu0 %v665
  %731 = vmatprep.subr.bf16.mxu0 %v668
  %732 = vmatpush1.bf16.msra.mxu0 %v667
  %733 = vmatprep.subr.bf16.mxu0 %v670
  %734 = vmatpush1.bf16.msra.mxu0 %v669
  %735 = vmatprep.subr.bf16.mxu0 %v672
  %736 = vmatpush1.bf16.msra.mxu0 %v671
  %737 = vmatprep.subr.bf16.mxu0 %v674
  %738 = vmatpush1.bf16.msra.mxu0 %v673
  %739 = vmatprep.subr.bf16.mxu0 %v676
  %740 = vmatpush1.bf16.msra.mxu0 %v675
  %741 = vmatprep.subr.bf16.mxu0 %v678
  %742 = vmatpush1.bf16.msra.mxu0 %v677
  %743 = vmatprep.subr.bf16.mxu0 %v680
  %744 = vmatpush1.bf16.msra.mxu0 %v679
  %745 = vmatprep.subr.bf16.mxu0 %v682
  %746 = vmatpush1.bf16.msra.mxu0 %v681
  %747 = vmatprep.subr.bf16.mxu0 %v684
  %748 = vmatpush1.bf16.msra.mxu0 %v683
  %749 = vmatprep.subr.bf16.mxu0 %v686
  %750 = vmatpush1.bf16.msra.mxu0 %v685
  %751 = vmatprep.subr.bf16.mxu0 %v688
  %752 = vmatpush1.bf16.msra.mxu0 %v687
  %753 = vmatprep.subr.bf16.mxu0 %v690
  %754 = vmatpush1.bf16.msra.mxu0 %v689
  %755 = vmatprep.subr.bf16.mxu0 %v692
  %756 = vmatpush1.bf16.msra.mxu0 %v691
  %757 = vmatprep.subr.bf16.mxu0 %v694
  %758 = vmatpush1.bf16.msra.mxu0 %v693
  %759 = vmatprep.mubr.bf16.mxu0 %v522
  %760 = vmatmul.mubr.bf16.gmra.mrb[0].mxu0 %v521
  %v761 = vpop.f32.mrb[0].mxu0
  %v762 = vadd.f32 %v560, %v761
  %v763 = vpop.f32.mrb[0].mxu0
  %v764 = vadd.f32 %v564, %v763
  %v765 = vpop.f32.mrb[0].mxu0
  %v766 = vpop.f32.mrb[0].mxu0
  %767 = vdwg.mxu0
  %v768 = vmax.f32 %v762, 0.0
  %v769 = vmax.f32 %v764, 0.0
  %v770 = vpack.c.bf16 %v768, %v768
  %v771 = vpack.c.bf16 %v769, %v769
  %v772 = vld [vmem:[%s5] sm:$0xff]
  %v773 = vld [vmem:[%s5 + $0x8] sm:$0xff]
  %v774 = vld [vmem:[%s5 + $0x10] sm:$0xff]
  %v775 = vld [vmem:[%s5 + $0x18] sm:$0xff]
  %v776 = vld [vmem:[%s5 + $0x20] sm:$0xff]
  %v777 = vld [vmem:[%s5 + $0x28] sm:$0xff]
  %v778 = vld [vmem:[%s5 + $0x30] sm:$0xff]
  %v779 = vld [vmem:[%s5 + $0x38] sm:$0xff]
  %v780 = vld [vmem:[%s5 + $0x40] sm:$0xff]
  %v781 = vld [vmem:[%s5 + $0x48] sm:$0xff]
  %v782 = vld [vmem:[%s5 + $0x50] sm:$0xff]
  %v783 = vld [vmem:[%s5 + $0x58] sm:$0xff]
  %v784 = vld [vmem:[%s5 + $0x60] sm:$0xff]
  %v785 = vld [vmem:[%s5 + $0x68] sm:$0xff]
  %v786 = vld [vmem:[%s5 + $0x70] sm:$0xff]
  %v787 = vld [vmem:[%s5 + $0x78] sm:$0xff]
  %v788 = vld [vmem:[%s5 + $0x80] sm:$0xff]
  %v789 = vld [vmem:[%s5 + $0x88] sm:$0xff]
  %v790 = vld [vmem:[%s5 + $0x90] sm:$0xff]
  %v791 = vld [vmem:[%s5 + $0x98] sm:$0xff]
  %v792 = vld [vmem:[%s5 + $0xa0] sm:$0xff]
  %v793 = vld [vmem:[%s5 + $0xa8] sm:$0xff]
  %v794 = vld [vmem:[%s5 + $0xb0] sm:$0xff]
  %v795 = vld [vmem:[%s5 + $0xb8] sm:$0xff]
  %v796 = vld [vmem:[%s5 + $0xc0] sm:$0xff]
  %v797 = vld [vmem:[%s5 + $0xc8] sm:$0xff]
  %v798 = vld [vmem:[%s5 + $0xd0] sm:$0xff]
  %v799 = vld [vmem:[%s5 + $0xd8] sm:$0xff]
  %v800 = vld [vmem:[%s5 + $0xe0] sm:$0xff]
  %v801 = vld [vmem:[%s5 + $0xe8] sm:$0xff]
  %v802 = vld [vmem:[%s5 + $0xf0] sm:$0xff]
  %v803 = vld [vmem:[%s5 + $0xf8] sm:$0xff]
  %v804 = vld [vmem:[%s6] sm:$0x3]
  %v806 = vlaneseq
  %v807 = vshrl.u32 %v806, 7
  %v808 = vsub.s32 0, %v807
  %v809 = vrot.slane %v804, %v808
  %v810 = vlaneseq
  %v811 = vshrl.u32 %v810, 7
  %v812 = vsub.s32 1, %v811
  %v813 = vrot.slane %v804, %v812
  %v848 = vunpack.c.l.b16 %v772
  %v849 = vunpack.c.h.b16 %v772
  %v850 = vunpack.c.l.b16 %v773
  %v851 = vunpack.c.h.b16 %v773
  %v852 = vunpack.c.l.b16 %v774
  %v853 = vunpack.c.h.b16 %v774
  %v854 = vunpack.c.l.b16 %v775
  %v855 = vunpack.c.h.b16 %v775
  %v856 = vunpack.c.l.b16 %v776
  %v857 = vunpack.c.h.b16 %v776
  %v858 = vunpack.c.l.b16 %v777
  %v859 = vunpack.c.h.b16 %v777
  %v860 = vunpack.c.l.b16 %v778
  %v861 = vunpack.c.h.b16 %v778
  %v862 = vunpack.c.l.b16 %v779
  %v863 = vunpack.c.h.b16 %v779
  %v864 = vunpack.c.l.b16 %v780
  %v865 = vunpack.c.h.b16 %v780
  %v866 = vunpack.c.l.b16 %v781
  %v867 = vunpack.c.h.b16 %v781
  %v868 = vunpack.c.l.b16 %v782
  %v869 = vunpack.c.h.b16 %v782
  %v870 = vunpack.c.l.b16 %v783
  %v871 = vunpack.c.h.b16 %v783
  %v872 = vunpack.c.l.b16 %v784
  %v873 = vunpack.c.h.b16 %v784
  %v874 = vunpack.c.l.b16 %v785
  %v875 = vunpack.c.h.b16 %v785
  %v876 = vunpack.c.l.b16 %v786
  %v877 = vunpack.c.h.b16 %v786
  %v878 = vunpack.c.l.b16 %v787
  %v879 = vunpack.c.h.b16 %v787
  %v880 = vunpack.c.l.b16 %v788
  %v881 = vunpack.c.h.b16 %v788
  %v882 = vunpack.c.l.b16 %v789
  %v883 = vunpack.c.h.b16 %v789
  %v884 = vunpack.c.l.b16 %v790
  %v885 = vunpack.c.h.b16 %v790
  %v886 = vunpack.c.l.b16 %v791
  %v887 = vunpack.c.h.b16 %v791
  %v888 = vunpack.c.l.b16 %v792
  %v889 = vunpack.c.h.b16 %v792
  %v890 = vunpack.c.l.b16 %v793
  %v891 = vunpack.c.h.b16 %v793
  %v892 = vunpack.c.l.b16 %v794
  %v893 = vunpack.c.h.b16 %v794
  %v894 = vunpack.c.l.b16 %v795
  %v895 = vunpack.c.h.b16 %v795
  %v896 = vunpack.c.l.b16 %v796
  %v897 = vunpack.c.h.b16 %v796
  %v898 = vunpack.c.l.b16 %v797
  %v899 = vunpack.c.h.b16 %v797
  %v900 = vunpack.c.l.b16 %v798
  %v901 = vunpack.c.h.b16 %v798
  %v902 = vunpack.c.l.b16 %v799
  %v903 = vunpack.c.h.b16 %v799
  %v904 = vunpack.c.l.b16 %v800
  %v905 = vunpack.c.h.b16 %v800
  %v906 = vunpack.c.l.b16 %v801
  %v907 = vunpack.c.h.b16 %v801
  %v908 = vunpack.c.l.b16 %v802
  %v909 = vunpack.c.h.b16 %v802
  %v910 = vunpack.c.l.b16 %v803
  %v911 = vunpack.c.h.b16 %v803
  %v912 = vpack.c.b16 %v850, %v848
  %v913 = vpack.c.b16 %v851, %v849
  %v914 = vpack.c.b16 %v854, %v852
  %v915 = vpack.c.b16 %v855, %v853
  %v916 = vpack.c.b16 %v858, %v856
  %v917 = vpack.c.b16 %v859, %v857
  %v918 = vpack.c.b16 %v862, %v860
  %v919 = vpack.c.b16 %v863, %v861
  %v920 = vpack.c.b16 %v866, %v864
  %v921 = vpack.c.b16 %v867, %v865
  %v922 = vpack.c.b16 %v870, %v868
  %v923 = vpack.c.b16 %v871, %v869
  %v924 = vpack.c.b16 %v874, %v872
  %v925 = vpack.c.b16 %v875, %v873
  %v926 = vpack.c.b16 %v878, %v876
  %v927 = vpack.c.b16 %v879, %v877
  %v928 = vpack.c.b16 %v882, %v880
  %v929 = vpack.c.b16 %v883, %v881
  %v930 = vpack.c.b16 %v886, %v884
  %v931 = vpack.c.b16 %v887, %v885
  %v932 = vpack.c.b16 %v890, %v888
  %v933 = vpack.c.b16 %v891, %v889
  %v934 = vpack.c.b16 %v894, %v892
  %v935 = vpack.c.b16 %v895, %v893
  %v936 = vpack.c.b16 %v898, %v896
  %v937 = vpack.c.b16 %v899, %v897
  %v938 = vpack.c.b16 %v902, %v900
  %v939 = vpack.c.b16 %v903, %v901
  %v940 = vpack.c.b16 %v906, %v904
  %v941 = vpack.c.b16 %v907, %v905
  %v942 = vpack.c.b16 %v910, %v908
  %v943 = vpack.c.b16 %v911, %v909
  %976 = vmatprep.subr.bf16.mxu0 %v913
  %977 = vmatpush1.bf16.msra.mxu0 %v912
  %978 = vmatprep.subr.bf16.mxu0 %v915
  %979 = vmatpush1.bf16.msra.mxu0 %v914
  %980 = vmatprep.subr.bf16.mxu0 %v917
  %981 = vmatpush1.bf16.msra.mxu0 %v916
  %982 = vmatprep.subr.bf16.mxu0 %v919
  %983 = vmatpush1.bf16.msra.mxu0 %v918
  %984 = vmatprep.subr.bf16.mxu0 %v921
  %985 = vmatpush1.bf16.msra.mxu0 %v920
  %986 = vmatprep.subr.bf16.mxu0 %v923
  %987 = vmatpush1.bf16.msra.mxu0 %v922
  %988 = vmatprep.subr.bf16.mxu0 %v925
  %989 = vmatpush1.bf16.msra.mxu0 %v924
  %990 = vmatprep.subr.bf16.mxu0 %v927
  %991 = vmatpush1.bf16.msra.mxu0 %v926
  %992 = vmatprep.subr.bf16.mxu0 %v929
  %993 = vmatpush1.bf16.msra.mxu0 %v928
  %994 = vmatprep.subr.bf16.mxu0 %v931
  %995 = vmatpush1.bf16.msra.mxu0 %v930
  %996 = vmatprep.subr.bf16.mxu0 %v933
  %997 = vmatpush1.bf16.msra.mxu0 %v932
  %998 = vmatprep.subr.bf16.mxu0 %v935
  %999 = vmatpush1.bf16.msra.mxu0 %v934
  %1000 = vmatprep.subr.bf16.mxu0 %v937
  %1001 = vmatpush1.bf16.msra.mxu0 %v936
  %1002 = vmatprep.subr.bf16.mxu0 %v939
  %1003 = vmatpush1.bf16.msra.mxu0 %v938
  %1004 = vmatprep.subr.bf16.mxu0 %v941
  %1005 = vmatpush1.bf16.msra.mxu0 %v940
  %1006 = vmatprep.subr.bf16.mxu0 %v943
  %1007 = vmatpush1.bf16.msra.mxu0 %v942
  %1008 = vmatprep.mubr.bf16.mxu0 %v771
  %1009 = vmatmul.mubr.bf16.gmra.mrb[0].mxu0 %v770
  %v1010 = vpop.f32.mrb[0].mxu0
  %v1011 = vadd.f32 %v809, %v1010
  %v1012 = vpop.f32.mrb[0].mxu0
  %v1013 = vadd.f32 %v813, %v1012
  %v1014 = vpop.f32.mrb[0].mxu0
  %v1015 = vpop.f32.mrb[0].mxu0
  %1016 = vdwg.mxu0
  %v1017 = vmax.f32 %v1011, 0.0
  %v1018 = vmax.f32 %v1013, 0.0
  %v1019 = vpack.c.bf16 %v1017, %v1017
  %v1020 = vpack.c.bf16 %v1018, %v1018
  %v1021 = vld [vmem:[%s7] sm:$0xf]
  %v1022 = vld [vmem:[%s7 + $0x4] sm:$0xf]
  %v1023 = vld [vmem:[%s7 + $0x8] sm:$0xf]
  %v1024 = vld [vmem:[%s7 + $0xc] sm:$0xf]
  %v1025 = vld [vmem:[%s7 + $0x10] sm:$0xf]
  %v1026 = vld [vmem:[%s7 + $0x14] sm:$0xf]
  %v1027 = vld [vmem:[%s7 + $0x18] sm:$0xf]
  %v1028 = vld [vmem:[%s7 + $0x1c] sm:$0xf]
  %v1029 = vld [vmem:[%s7 + $0x20] sm:$0xf]
  %v1030 = vld [vmem:[%s7 + $0x24] sm:$0xf]
  %v1031 = vld [vmem:[%s7 + $0x28] sm:$0xf]
  %v1032 = vld [vmem:[%s7 + $0x2c] sm:$0xf]
  %v1033 = vld [vmem:[%s7 + $0x30] sm:$0xf]
  %v1034 = vld [vmem:[%s7 + $0x34] sm:$0xf]
  %v1035 = vld [vmem:[%s7 + $0x38] sm:$0xf]
  %v1036 = vld [vmem:[%s7 + $0x3c] sm:$0xf]
  %v1037 = vld [vmem:[%s7 + $0x40] sm:$0xf]
  %v1038 = vld [vmem:[%s7 + $0x44] sm:$0xf]
  %v1039 = vld [vmem:[%s7 + $0x48] sm:$0xf]
  %v1040 = vld [vmem:[%s7 + $0x4c] sm:$0xf]
  %v1041 = vld [vmem:[%s7 + $0x50] sm:$0xf]
  %v1042 = vld [vmem:[%s7 + $0x54] sm:$0xf]
  %v1043 = vld [vmem:[%s7 + $0x58] sm:$0xf]
  %v1044 = vld [vmem:[%s7 + $0x5c] sm:$0xf]
  %v1045 = vld [vmem:[%s7 + $0x60] sm:$0xf]
  %v1046 = vld [vmem:[%s7 + $0x64] sm:$0xf]
  %v1047 = vld [vmem:[%s7 + $0x68] sm:$0xf]
  %v1048 = vld [vmem:[%s7 + $0x6c] sm:$0xf]
  %v1049 = vld [vmem:[%s7 + $0x70] sm:$0xf]
  %v1050 = vld [vmem:[%s7 + $0x74] sm:$0xf]
  %v1051 = vld [vmem:[%s7 + $0x78] sm:$0xf]
  %v1052 = vld [vmem:[%s7 + $0x7c] sm:$0xf]
  %v1053 = vld [vmem:[%s8] sm:$0x1]
  %v1055 = vlaneseq
  %v1056 = vshrl.u32 %v1055, 7
  %v1057 = vsub.s32 0, %v1056
  %v1058 = vrot.slane %v1053, %v1057
  %v1092 = vunpack.c.l.b16 %v1021
  %v1093 = vunpack.c.l.b16 %v1022
  %v1094 = vunpack.c.l.b16 %v1023
  %v1095 = vunpack.c.l.b16 %v1024
  %v1096 = vunpack.c.l.b16 %v1025
  %v1097 = vunpack.c.l.b16 %v1026
  %v1098 = vunpack.c.l.b16 %v1027
  %v1099 = vunpack.c.l.b16 %v1028
  %v1100 = vunpack.c.l.b16 %v1029
  %v1101 = vunpack.c.l.b16 %v1030
  %v1102 = vunpack.c.l.b16 %v1031
  %v1103 = vunpack.c.l.b16 %v1032
  %v1104 = vunpack.c.l.b16 %v1033
  %v1105 = vunpack.c.l.b16 %v1034
  %v1106 = vunpack.c.l.b16 %v1035
  %v1107 = vunpack.c.l.b16 %v1036
  %v1108 = vunpack.c.l.b16 %v1037
  %v1109 = vunpack.c.l.b16 %v1038
  %v1110 = vunpack.c.l.b16 %v1039
  %v1111 = vunpack.c.l.b16 %v1040
  %v1112 = vunpack.c.l.b16 %v1041
  %v1113 = vunpack.c.l.b16 %v1042
  %v1114 = vunpack.c.l.b16 %v1043
  %v1115 = vunpack.c.l.b16 %v1044
  %v1116 = vunpack.c.l.b16 %v1045
  %v1117 = vunpack.c.l.b16 %v1046
  %v1118 = vunpack.c.l.b16 %v1047
  %v1119 = vunpack.c.l.b16 %v1048
  %v1120 = vunpack.c.l.b16 %v1049
  %v1121 = vunpack.c.l.b16 %v1050
  %v1122 = vunpack.c.l.b16 %v1051
  %v1123 = vunpack.c.l.b16 %v1052
  %v1124 = vpack.c.b16 %v1093, %v1092
  %v1125 = vpack.c.b16 %v1095, %v1094
  %v1126 = vpack.c.b16 %v1097, %v1096
  %v1127 = vpack.c.b16 %v1099, %v1098
  %v1128 = vpack.c.b16 %v1101, %v1100
  %v1129 = vpack.c.b16 %v1103, %v1102
  %v1130 = vpack.c.b16 %v1105, %v1104
  %v1131 = vpack.c.b16 %v1107, %v1106
  %v1132 = vpack.c.b16 %v1109, %v1108
  %v1133 = vpack.c.b16 %v1111, %v1110
  %v1134 = vpack.c.b16 %v1113, %v1112
  %v1135 = vpack.c.b16 %v1115, %v1114
  %v1136 = vpack.c.b16 %v1117, %v1116
  %v1137 = vpack.c.b16 %v1119, %v1118
  %v1138 = vpack.c.b16 %v1121, %v1120
  %v1139 = vpack.c.b16 %v1123, %v1122
  %1156 = vmatprep.subr.bf16.mxu0 0
  %1157 = vmatpush1.bf16.msra.mxu0 %v1124
  %1158 = vmatprep.subr.bf16.mxu0 0
  %1159 = vmatpush1.bf16.msra.mxu0 %v1125
  %1160 = vmatprep.subr.bf16.mxu0 0
  %1161 = vmatpush1.bf16.msra.mxu0 %v1126
  %1162 = vmatprep.subr.bf16.mxu0 0
  %1163 = vmatpush1.bf16.msra.mxu0 %v1127
  %1164 = vmatprep.subr.bf16.mxu0 0
  %1165 = vmatpush1.bf16.msra.mxu0 %v1128
  %1166 = vmatprep.subr.bf16.mxu0 0
  %1167 = vmatpush1.bf16.msra.mxu0 %v1129
  %1168 = vmatprep.subr.bf16.mxu0 0
  %1169 = vmatpush1.bf16.msra.mxu0 %v1130
  %1170 = vmatprep.subr.bf16.mxu0 0
  %1171 = vmatpush1.bf16.msra.mxu0 %v1131
  %1172 = vmatprep.subr.bf16.mxu0 0
  %1173 = vmatpush1.bf16.msra.mxu0 %v1132
  %1174 = vmatprep.subr.bf16.mxu0 0
  %1175 = vmatpush1.bf16.msra.mxu0 %v1133
  %1176 = vmatprep.subr.bf16.mxu0 0
  %1177 = vmatpush1.bf16.msra.mxu0 %v1134
  %1178 = vmatprep.subr.bf16.mxu0 0
  %1179 = vmatpush1.bf16.msra.mxu0 %v1135
  %1180 = vmatprep.subr.bf16.mxu0 0
  %1181 = vmatpush1.bf16.msra.mxu0 %v1136
  %1182 = vmatprep.subr.bf16.mxu0 0
  %1183 = vmatpush1.bf16.msra.mxu0 %v1137
  %1184 = vmatprep.subr.bf16.mxu0 0
  %1185 = vmatpush1.bf16.msra.mxu0 %v1138
  %1186 = vmatprep.subr.bf16.mxu0 0
  %1187 = vmatpush1.bf16.msra.mxu0 %v1139
  %1188 = vmatprep.mubr.bf16.mxu0 %v1020
  %1189 = vmatmul.mubr.bf16.gmra.mrb[0].mxu0 %v1019
  %v1190 = vpop.f32.mrb[0].mxu0
  %v1191 = vadd.f32 %v1058, %v1190
  %v1192 = vpop.f32.mrb[0].mxu0
  %v1193 = vpop.f32.mrb[0].mxu0
  %v1194 = vpop.f32.mrb[0].mxu0
  %1195 = vdwg.mxu0
  %1196 = vmax.xlane.f32.xlu0 %v1191
  %v1197 = vpop.xlane.xlu0 %1196
  %v1198 = vsub.f32 %v1191, %v1197
  %v1199 = vmul.f32 %v1198, 1.442695
  %v1200 = vpow.pop %v1199
  %1201 = vadd.xlane.f32.xlu0 %v1200
  %v1202 = vpop.xlane.xlu0 %1201
  %v1203 = vrcp.pop %v1202
  %v1204 = vmul.f32 %v1200, %v1203
  %1205 = vst [vmem:[%s9] sm:$0xff] %v1204
  // Predicated region
  $region38: #{kitty_argmax_forward.1} parent=0 // pred_check
    _
  $region39: #{kitty_argmax_forward.1} parent=0 // pred_check_branch
    %1207 = sbr.rel (0) target = $region41
  $region40: #{kitty_argmax_forward.1} parent=0 // pred_region
    _
  $region41: #{kitty_argmax_forward.1} parent=0 // pred_fallthru
    _
  // Predicated region
  $region42: #{kitty_argmax_forward.1} parent=0 // pred_check
    _
  $region43: #{kitty_argmax_forward.1} parent=0 // pred_check_branch
    %1209 = sbr.rel (0) target = $region45
  $region44: #{kitty_argmax_forward.1} parent=0 // pred_region
    _
  $region45: #{kitty_argmax_forward.1} parent=0 // pred_fallthru
    _

</llo_original>
